<compile_context>
chip_gen: v6e
topology: v6e:2x2x1
jax: 0.10.0
libtpu: 0.0.40
codegen_flags: <defaults>
</compile_context>

<pallas_src>
import jax
import jax.numpy as jnp
from jax.experimental import pallas as pl
from jax.experimental.pallas import tpu as pltpu

_LANE = 128
_MAX_COLS = 32768                 # widest lane-dense row we will form
_MAX_OUTSTANDING_DMAS = 8         # chunked HBM->HBM copies in flight at once
_CHUNK_BYTES_TARGET = 8 * 1024 * 1024  # aim ~8 MiB per DMA descriptor


def _pick_cols(total: int) -> int:
    """Largest multiple-of-128 divisor of `total`, capped at _MAX_COLS (0 if none)."""
    hi = min(_MAX_COLS, total)
    hi -= hi % _LANE
    for cols in range(hi, _LANE - 1, -_LANE):
        if total % cols == 0:
            return cols
    return 0


def _as_2d(x: jax.Array) -> jax.Array:
    """Reshape to a 2D slab, preferring a wide lane-dense (multiple-of-128) last dim."""
    total = x.size
    if total % _LANE == 0:
        cols = _pick_cols(total)
        if cols:
            return x.reshape(total // cols, cols)
    # Fallback for totals not divisible by 128 (rare): keep last dim as-is.
    if x.ndim == 0:
        return x.reshape(1, 1)
    if x.ndim == 1:
        return x.reshape(1, -1)
    return x.reshape(-1, x.shape[-1])


def _row_chunks(rows: int, cols: int, itemsize: int):
    """Static (start, size) row chunks: ~_CHUNK_BYTES_TARGET each, <= 8 outstanding."""
    bytes_total = rows * cols * itemsize
    want = max(1, -(-bytes_total // _CHUNK_BYTES_TARGET))  # ceil-div
    k = max(1, min(_MAX_OUTSTANDING_DMAS, rows, want))
    base, rem = divmod(rows, k)
    chunks, start = [], 0
    for i in range(k):
        size = base + (1 if i < rem else 0)
        if size:
            chunks.append((start, size))
            start += size
    return tuple(chunks)


def _make_dma_copy_kernel(chunks):
    """Kernel: issue all chunked HBM->HBM DMAs, then wait on all of them."""

    def kernel(x_hbm, o_hbm, sem):
        copies = []
        for k, (start, size) in enumerate(chunks):  # static unrolled at trace time
            cp = pltpu.make_async_copy(
                x_hbm.at[pl.ds(start, size), :],
                o_hbm.at[pl.ds(start, size), :],
                sem.at[k],
            )
            cp.start()
            copies.append(cp)
        for cp in copies:
            cp.wait()

    return kernel


def identity(x: jax.Array, *, materialize: bool = False) -> jax.Array:
    """Identity forward pass.

    materialize=False (default): return the input unchanged (zero-cost, exactly
    the PyTorch semantics). materialize=True: produce an independent output
    buffer via a chunked HBM->HBM DMA copy kernel (no VMEM staging).
    """
    if not materialize:
        return x
    if x.size == 0:
        return x

    orig_shape = x.shape
    x2d = _as_2d(x)
    rows, cols = x2d.shape
    itemsize = x2d.dtype.itemsize
    chunks = _row_chunks(rows, cols, itemsize)

    out2d = pl.pallas_call(
        _make_dma_copy_kernel(chunks),
        out_shape=jax.ShapeDtypeStruct((rows, cols), x2d.dtype),
        in_specs=[pl.BlockSpec(memory_space=pl.ANY)],   # raw HBM ref, no auto-DMA
        out_specs=pl.BlockSpec(memory_space=pl.ANY),    # output written via DMA
        scratch_shapes=[pltpu.SemaphoreType.DMA((len(chunks),))],
        compiler_params=pltpu.CompilerParams(
            # Kernel uses (essentially) no VMEM; small limit is safe on every
            # generation including v7x's 64 MiB physical VMEM.
            vmem_limit_bytes=16 * 1024 * 1024,
        ),
        cost_estimate=pl.CostEstimate(
            flops=0,
            transcendentals=0,
            bytes_accessed=2 * rows * cols * itemsize,
        ),
    )(x2d)

    return out2d.reshape(orig_shape)


if __name__ == "__main__":
    key = jax.random.PRNGKey(0)
    # Small NCHW-shaped input, consistent with typical use of Identity in a conv net.
    x = jax.random.normal(key, (2, 4, 16, 16), dtype=jnp.float32)

    # Fast path (default): literally returns the input, zero cost.
    y_fast = identity(x)
    assert y_fast is x

    # Kernel path: materialized independent copy via HBM->HBM DMA.
    y = identity(x, materialize=True)
    jax.block_until_ready(y)

    assert y.shape == x.shape
    assert y.dtype == x.dtype
    assert bool(jnp.all(y == x))

    print("KERNEL_OK")
</pallas_src>

<mosaic_0001>
module attributes {stable_mosaic.version = 11 : i64} {
  func.func @kernel(%arg0: memref<1x2048xf32, #tpu.memory_space<any>>, %arg1: memref<1x2048xf32, #tpu.memory_space<any>>, %arg2: memref<1x!tpu.dma_semaphore, #tpu.memory_space<semaphore_mem>>) attributes {dimension_semantics = [], scalar_prefetch = 0 : i64, scratch_operands = 1 : i64, tpu.core_type = #tpu.core_type<tc>} {
    %c0_i32 = arith.constant 0 : i32
    %c0_i32_0 = arith.constant 0 : i32
    %c0_i32_1 = arith.constant 0 : i32
    %0 = tpu.memref_slice %arg0[%c0_i32_0, %c0_i32_1] : memref<1x2048xf32, #tpu.memory_space<any>> -> memref<1x2048xf32, #tpu.memory_space<any>>
    %c0_i32_2 = arith.constant 0 : i32
    %c0_i32_3 = arith.constant 0 : i32
    %1 = tpu.memref_slice %arg1[%c0_i32_2, %c0_i32_3] : memref<1x2048xf32, #tpu.memory_space<any>> -> memref<1x2048xf32, #tpu.memory_space<any>>
    %2 = tpu.memref_slice %arg2[%c0_i32] : memref<1x!tpu.dma_semaphore, #tpu.memory_space<semaphore_mem>> -> memref<1x!tpu.dma_semaphore, #tpu.memory_space<semaphore_mem>>
    %3 = tpu.memref_squeeze %2 : memref<1x!tpu.dma_semaphore, #tpu.memory_space<semaphore_mem>> -> memref<!tpu.dma_semaphore, #tpu.memory_space<semaphore_mem>>
    tpu.enqueue_dma source(%0 : memref<1x2048xf32, #tpu.memory_space<any>>) target(%1 : memref<1x2048xf32, #tpu.memory_space<any>>) target_semaphore(%3 : memref<!tpu.dma_semaphore, #tpu.memory_space<semaphore_mem>>)
    %c0_i32_4 = arith.constant 0 : i32
    %c0_i32_5 = arith.constant 0 : i32
    %c0_i32_6 = arith.constant 0 : i32
    %4 = tpu.memref_slice %arg0[%c0_i32_5, %c0_i32_6] : memref<1x2048xf32, #tpu.memory_space<any>> -> memref<1x2048xf32, #tpu.memory_space<any>>
    %c0_i32_7 = arith.constant 0 : i32
    %c0_i32_8 = arith.constant 0 : i32
    %5 = tpu.memref_slice %arg1[%c0_i32_7, %c0_i32_8] : memref<1x2048xf32, #tpu.memory_space<any>> -> memref<1x2048xf32, #tpu.memory_space<any>>
    %6 = tpu.memref_slice %arg2[%c0_i32_4] : memref<1x!tpu.dma_semaphore, #tpu.memory_space<semaphore_mem>> -> memref<1x!tpu.dma_semaphore, #tpu.memory_space<semaphore_mem>>
    %7 = tpu.memref_squeeze %6 : memref<1x!tpu.dma_semaphore, #tpu.memory_space<semaphore_mem>> -> memref<!tpu.dma_semaphore, #tpu.memory_space<semaphore_mem>>
    tpu.wait_dma2 semaphore(%7 : memref<!tpu.dma_semaphore, #tpu.memory_space<semaphore_mem>>) src(%4 : memref<1x2048xf32, #tpu.memory_space<any>>) dst(%5 : memref<1x2048xf32, #tpu.memory_space<any>>)
    return
  }
}

</mosaic_0001>

<llo_original>
// kernel: tpu_custom_call.1
$region0: #{tpu_custom_call.1}
  #allocation0 [shape = 'u32[]', space=smem, size = 0x4, offset = 0x4, fixed_abs, tag = 'smem constant byte address 0x4 - core index']
  #allocation1 [shape = 'u32[144,128]{1,0:T(1,128)}', space=vmem, size = 0x12000, scoped, tag = 'internal scratch']
  #allocation2 [shape = 's32[1]{0}', space=sflag, size = 0x4, scoped, tag = 'scratch operand']
  #allocation3 [shape = 's32[]', space=sflag, size = 0x4, offset = 0, fixed_abs, tag = 'sflag constant byte address 0x0 - dummy sync flag']
  #allocation4 [shape = 'u32[0]{0}', space=smem, size = 0, offset = 0, fixed_abs, tag = 'smem constant byte address 0x0 - null']
  %s0 = inlined_call_operand.hbm [shape: f32[1,2048], index: 0, kind: input, shape index: {}]
  %s1 = inlined_call_operand.hbm [shape: f32[1,2048], index: 1, kind: output, shape index: {}]
  %s2 = sld [smem:[#allocation0]]
  $region2: #{tpu_custom_call.1} parent=0
    _
  %s4 = ssub.s32 1, %s2
  %s5 = scalar_select 0, %s4, %s2
  %s7 = sshll.u32 1, 14
  %s8 = sxor.u32 4294967295, %s7
  %12 = dma.general %s0, 256, %s1, [#allocation2], 131072, [#allocation4], 0, 0
  %s13 = smul.u32 1, 16
  %s14 = sshll.u32 %s13, 4
  %15 = dma.done [#allocation2], %s14
  %16 = vsyncmov [#allocation2]
  %s17 = vpop.sfrf %16
  %p18 = scmp.eq.s32.totalorder %s17, 0
  %p19 = pneg %p18
  %21 = shalt.err (%p19)

</llo_original>
